<compile_context>
chip_gen: v7x
topology: tpu7x:2x2x1
jax: 0.10.0
libtpu: 0.0.40
codegen_flags: <defaults>
</compile_context>

<pallas_src>
import math
import jax
import jax.numpy as jnp
from jax.experimental import pallas as pl
from jax.experimental.pallas import tpu as pltpu

INPUT_DIM = 128
LATENT_DIM = 2
FEATS = [512, 256, 128, 64, 32]
OUT_PAD = 128          # lane-dense padded width of the final layer output
DEFAULT_TB = 1024      # batch tile (rows); << 32 MiB scoped VMEM even on v7x

_INV_SQRT2 = 1.0 / math.sqrt(2.0)


def _round_up(n, m):
    return ((n + m - 1) // m) * m


def _gelu_exact(x):
    # PyTorch nn.GELU() default = exact erf-based GELU (kept in f32).
    return 0.5 * x * (1.0 + jax.lax.erf(x * _INV_SQRT2))


def ae_encoder_kernel(x_ref,
                      w1_ref, b1_ref,
                      w2_ref, b2_ref,
                      w3_ref, b3_ref,
                      w4_ref, b4_ref,
                      w5_ref, b5_ref,
                      w6_ref, b6_ref,
                      out_ref):
    # bf16 into the MXU, f32 accumulate + bias + GELU.  The Python loop unrolls
    # at trace time into 6 back-to-back MXU matmuls on VMEM-resident weights.
    h = x_ref[...].astype(jnp.bfloat16)
    for w_ref, b_ref in ((w1_ref, b1_ref), (w2_ref, b2_ref), (w3_ref, b3_ref),
                         (w4_ref, b4_ref), (w5_ref, b5_ref)):
        y = jnp.dot(h, w_ref[...], preferred_element_type=jnp.float32) + b_ref[...]
        h = _gelu_exact(y).astype(jnp.bfloat16)
    # Final (padded, lane-dense) layer: (TB, 32) @ (32, 128) + (1, 128).
    z = jnp.dot(h, w6_ref[...], preferred_element_type=jnp.float32) + b6_ref[...]
    out_ref[...] = z.astype(out_ref.dtype)


def init_params(key, input_dim=INPUT_DIM, latent_dim=LATENT_DIM, feats=FEATS):
    """Deterministic init matching nn.Linear shapes (stored transposed as [in, out])."""
    dims = [input_dim] + list(feats) + [latent_dim]
    params = []
    for i in range(len(dims) - 1):
        key, wk, bk = jax.random.split(key, 3)
        bound = 1.0 / math.sqrt(dims[i])
        w = jax.random.uniform(wk, (dims[i], dims[i + 1]), jnp.float32, -bound, bound)
        b = jax.random.uniform(bk, (1, dims[i + 1]), jnp.float32, -bound, bound)
        params.append((w, b))
    return params


def prepare_params(params):
    """One-time prep: cast weights to bf16 and zero-pad the final layer to 128
    output lanes.  Done outside the forward so it is not repeated per call."""
    flat = []
    n = len(params)
    for i, (w, b) in enumerate(params):
        if i == n - 1:
            w = jnp.pad(w, ((0, 0), (0, OUT_PAD - w.shape[1])))
            b = jnp.pad(b, ((0, 0), (0, OUT_PAD - b.shape[1])))
        flat.append(jnp.asarray(w, jnp.bfloat16))
        flat.append(jnp.asarray(b, jnp.float32))
    return flat


def ae_encoder(x, flat_params, *, tb=DEFAULT_TB):
    B = x.shape[0]
    # Batch tile: multiple of 8 (sublane rule); pad B up to a whole number of tiles.
    TB = min(tb, _round_up(B, 8))
    Bp = _round_up(B, TB)
    if Bp != B:
        x = jnp.pad(x, ((0, Bp - B), (0, 0)))

    grid = (Bp // TB,)

    x_spec = pl.BlockSpec((TB, INPUT_DIM), lambda i: (i, 0))
    out_spec = pl.BlockSpec((TB, OUT_PAD), lambda i: (i, 0))
    # Weights/biases: constant block index -> fetched once, VMEM-resident across tiles.
    param_specs = [pl.BlockSpec(p.shape, lambda i: (0, 0)) for p in flat_params]

    per_row_macs = sum(int(w.shape[0]) * int(w.shape[1]) for w in flat_params[0::2])
    weight_bytes = sum(int(p.size) * p.dtype.itemsize for p in flat_params)
    cost = pl.CostEstimate(
        flops=2 * Bp * per_row_macs,
        transcendentals=Bp * sum(FEATS),
        bytes_accessed=weight_bytes + Bp * (INPUT_DIM + OUT_PAD) * 4,
    )

    out_padded = pl.pallas_call(
        ae_encoder_kernel,
        out_shape=jax.ShapeDtypeStruct((Bp, OUT_PAD), jnp.float32),
        grid=grid,
        in_specs=[x_spec] + param_specs,
        out_specs=out_spec,
        compiler_params=pltpu.CompilerParams(
            dimension_semantics=("parallel",)),
        cost_estimate=cost,
    )(x, *flat_params)

    return out_padded[:B, :LATENT_DIM]


def ae_encoder_ref(x, params):
    """Pure-JAX reference mirroring the kernel numerics (bf16 matmul, f32 accumulate)."""
    h = x.astype(jnp.bfloat16)
    for i, (w, b) in enumerate(params):
        y = jnp.dot(h, w.astype(jnp.bfloat16), preferred_element_type=jnp.float32) + b
        if i < len(params) - 1:
            h = _gelu_exact(y).astype(jnp.bfloat16)
        else:
            h = y
    return h


if __name__ == "__main__":
    key = jax.random.PRNGKey(0)
    key, xk, pk = jax.random.split(key, 3)

    B = 8
    x = jax.random.normal(xk, (B, INPUT_DIM), dtype=jnp.float32)
    params = init_params(pk)
    flat = prepare_params(params)

    run = jax.jit(lambda xx: ae_encoder(xx, flat))
    z = run(x)
    jax.block_until_ready(z)

    z_ref = ae_encoder_ref(x, params)
    assert z.shape == (B, LATENT_DIM)
    assert jnp.allclose(z, z_ref, atol=1e-3, rtol=1e-3), "mismatch vs pure-JAX reference"

    print("KERNEL_OK")
</pallas_src>

<mosaic_0001>
module attributes {stable_mosaic.version = 11 : i64} {
  func.func @ae_encoder_kernel(%arg0: i32, %arg1: memref<8x128xf32, #tpu.memory_space<vmem>>, %arg2: memref<128x512xbf16, #tpu.memory_space<vmem>>, %arg3: memref<1x512xf32, #tpu.memory_space<vmem>>, %arg4: memref<512x256xbf16, #tpu.memory_space<vmem>>, %arg5: memref<1x256xf32, #tpu.memory_space<vmem>>, %arg6: memref<256x128xbf16, #tpu.memory_space<vmem>>, %arg7: memref<1x128xf32, #tpu.memory_space<vmem>>, %arg8: memref<128x64xbf16, #tpu.memory_space<vmem>>, %arg9: memref<1x64xf32, #tpu.memory_space<vmem>>, %arg10: memref<64x32xbf16, #tpu.memory_space<vmem>>, %arg11: memref<1x32xf32, #tpu.memory_space<vmem>>, %arg12: memref<32x128xbf16, #tpu.memory_space<vmem>>, %arg13: memref<1x128xf32, #tpu.memory_space<vmem>>, %arg14: memref<8x128xf32, #tpu.memory_space<vmem>>) attributes {dimension_semantics = [#tpu.dimension_semantics<parallel>], iteration_bounds = array<i64: 1>, scalar_prefetch = 0 : i64, scratch_operands = 0 : i64, tpu.core_type = #tpu.core_type<tc>, window_params = [{transform_indices = @transform_0, window_bounds = array<i64: 8, 128>}, {pipeline_mode = #tpu.pipeline_mode<synchronous>, transform_indices = @transform_1, window_bounds = array<i64: 128, 512>}, {pipeline_mode = #tpu.pipeline_mode<synchronous>, transform_indices = @transform_2, window_bounds = array<i64: 1, 512>}, {pipeline_mode = #tpu.pipeline_mode<synchronous>, transform_indices = @transform_3, window_bounds = array<i64: 512, 256>}, {pipeline_mode = #tpu.pipeline_mode<synchronous>, transform_indices = @transform_4, window_bounds = array<i64: 1, 256>}, {pipeline_mode = #tpu.pipeline_mode<synchronous>, transform_indices = @transform_5, window_bounds = array<i64: 256, 128>}, {pipeline_mode = #tpu.pipeline_mode<synchronous>, transform_indices = @transform_6, window_bounds = array<i64: 1, 128>}, {pipeline_mode = #tpu.pipeline_mode<synchronous>, transform_indices = @transform_7, window_bounds = array<i64: 128, 64>}, {pipeline_mode = #tpu.pipeline_mode<synchronous>, transform_indices = @transform_8, window_bounds = array<i64: 1, 64>}, {pipeline_mode = #tpu.pipeline_mode<synchronous>, transform_indices = @transform_9, window_bounds = array<i64: 64, 32>}, {pipeline_mode = #tpu.pipeline_mode<synchronous>, transform_indices = @transform_10, window_bounds = array<i64: 1, 32>}, {pipeline_mode = #tpu.pipeline_mode<synchronous>, transform_indices = @transform_11, window_bounds = array<i64: 32, 128>}, {pipeline_mode = #tpu.pipeline_mode<synchronous>, transform_indices = @transform_12, window_bounds = array<i64: 1, 128>}, {transform_indices = @transform_13, window_bounds = array<i64: 8, 128>}]} {
    %c0 = arith.constant 0 : index
    %c0_0 = arith.constant 0 : index
    %0 = vector.load %arg1[%c0, %c0_0] : memref<8x128xf32, #tpu.memory_space<vmem>>, vector<8x128xf32>
    %1 = arith.truncf %0 : vector<8x128xf32> to vector<8x128xbf16>
    %c0_1 = arith.constant 0 : index
    %c0_2 = arith.constant 0 : index
    %2 = vector.load %arg2[%c0_1, %c0_2] : memref<128x512xbf16, #tpu.memory_space<vmem>>, vector<128x512xbf16>
    %cst = arith.constant dense<0.000000e+00> : vector<8x512xf32>
    %3 = tpu.matmul %1, %2, %cst {dimension_numbers = #tpu.dot_dimension_numbers<[1], [0], [0], [1], [0, 0, 1, 1], [], []>} : vector<8x128xbf16>, vector<128x512xbf16>, vector<8x512xf32> -> vector<8x512xf32>
    %c0_3 = arith.constant 0 : index
    %c0_4 = arith.constant 0 : index
    %4 = vector.load %arg3[%c0_3, %c0_4] : memref<1x512xf32, #tpu.memory_space<vmem>>, vector<1x512xf32>
    %5 = vector.broadcast %4 : vector<1x512xf32> to vector<8x512xf32>
    %6 = arith.addf %3, %5 : vector<8x512xf32>
    %cst_5 = arith.constant 5.000000e-01 : f32
    %7 = vector.broadcast %cst_5 : f32 to vector<8x512xf32>
    %8 = arith.mulf %7, %6 : vector<8x512xf32>
    %cst_6 = arith.constant 0.707106769 : f32
    %9 = vector.broadcast %cst_6 : f32 to vector<8x512xf32>
    %10 = arith.mulf %6, %9 : vector<8x512xf32>
    %11 = math.erf %10 : vector<8x512xf32>
    %cst_7 = arith.constant 1.000000e+00 : f32
    %12 = vector.broadcast %cst_7 : f32 to vector<8x512xf32>
    %13 = arith.addf %12, %11 : vector<8x512xf32>
    %14 = arith.mulf %8, %13 : vector<8x512xf32>
    %15 = arith.truncf %14 : vector<8x512xf32> to vector<8x512xbf16>
    %c0_8 = arith.constant 0 : index
    %c0_9 = arith.constant 0 : index
    %16 = vector.load %arg4[%c0_8, %c0_9] : memref<512x256xbf16, #tpu.memory_space<vmem>>, vector<512x256xbf16>
    %cst_10 = arith.constant dense<0.000000e+00> : vector<8x256xf32>
    %17 = tpu.matmul %15, %16, %cst_10 {dimension_numbers = #tpu.dot_dimension_numbers<[1], [0], [0], [1], [0, 0, 1, 1], [], []>} : vector<8x512xbf16>, vector<512x256xbf16>, vector<8x256xf32> -> vector<8x256xf32>
    %c0_11 = arith.constant 0 : index
    %c0_12 = arith.constant 0 : index
    %18 = vector.load %arg5[%c0_11, %c0_12] : memref<1x256xf32, #tpu.memory_space<vmem>>, vector<1x256xf32>
    %19 = vector.broadcast %18 : vector<1x256xf32> to vector<8x256xf32>
    %20 = arith.addf %17, %19 : vector<8x256xf32>
    %cst_13 = arith.constant 5.000000e-01 : f32
    %21 = vector.broadcast %cst_13 : f32 to vector<8x256xf32>
    %22 = arith.mulf %21, %20 : vector<8x256xf32>
    %cst_14 = arith.constant 0.707106769 : f32
    %23 = vector.broadcast %cst_14 : f32 to vector<8x256xf32>
    %24 = arith.mulf %20, %23 : vector<8x256xf32>
    %25 = math.erf %24 : vector<8x256xf32>
    %cst_15 = arith.constant 1.000000e+00 : f32
    %26 = vector.broadcast %cst_15 : f32 to vector<8x256xf32>
    %27 = arith.addf %26, %25 : vector<8x256xf32>
    %28 = arith.mulf %22, %27 : vector<8x256xf32>
    %29 = arith.truncf %28 : vector<8x256xf32> to vector<8x256xbf16>
    %c0_16 = arith.constant 0 : index
    %c0_17 = arith.constant 0 : index
    %30 = vector.load %arg6[%c0_16, %c0_17] : memref<256x128xbf16, #tpu.memory_space<vmem>>, vector<256x128xbf16>
    %cst_18 = arith.constant dense<0.000000e+00> : vector<8x128xf32>
    %31 = tpu.matmul %29, %30, %cst_18 {dimension_numbers = #tpu.dot_dimension_numbers<[1], [0], [0], [1], [0, 0, 1, 1], [], []>} : vector<8x256xbf16>, vector<256x128xbf16>, vector<8x128xf32> -> vector<8x128xf32>
    %c0_19 = arith.constant 0 : index
    %c0_20 = arith.constant 0 : index
    %32 = vector.load %arg7[%c0_19, %c0_20] : memref<1x128xf32, #tpu.memory_space<vmem>>, vector<1x128xf32>
    %33 = vector.broadcast %32 : vector<1x128xf32> to vector<8x128xf32>
    %34 = arith.addf %31, %33 : vector<8x128xf32>
    %cst_21 = arith.constant 5.000000e-01 : f32
    %35 = vector.broadcast %cst_21 : f32 to vector<8x128xf32>
    %36 = arith.mulf %35, %34 : vector<8x128xf32>
    %cst_22 = arith.constant 0.707106769 : f32
    %37 = vector.broadcast %cst_22 : f32 to vector<8x128xf32>
    %38 = arith.mulf %34, %37 : vector<8x128xf32>
    %39 = math.erf %38 : vector<8x128xf32>
    %cst_23 = arith.constant 1.000000e+00 : f32
    %40 = vector.broadcast %cst_23 : f32 to vector<8x128xf32>
    %41 = arith.addf %40, %39 : vector<8x128xf32>
    %42 = arith.mulf %36, %41 : vector<8x128xf32>
    %43 = arith.truncf %42 : vector<8x128xf32> to vector<8x128xbf16>
    %c0_24 = arith.constant 0 : index
    %c0_25 = arith.constant 0 : index
    %44 = vector.load %arg8[%c0_24, %c0_25] : memref<128x64xbf16, #tpu.memory_space<vmem>>, vector<128x64xbf16>
    %cst_26 = arith.constant dense<0.000000e+00> : vector<8x64xf32>
    %45 = tpu.matmul %43, %44, %cst_26 {dimension_numbers = #tpu.dot_dimension_numbers<[1], [0], [0], [1], [0, 0, 1, 1], [], []>} : vector<8x128xbf16>, vector<128x64xbf16>, vector<8x64xf32> -> vector<8x64xf32>
    %c0_27 = arith.constant 0 : index
    %c0_28 = arith.constant 0 : index
    %46 = vector.load %arg9[%c0_27, %c0_28] : memref<1x64xf32, #tpu.memory_space<vmem>>, vector<1x64xf32>
    %47 = vector.broadcast %46 : vector<1x64xf32> to vector<8x64xf32>
    %48 = arith.addf %45, %47 : vector<8x64xf32>
    %cst_29 = arith.constant 5.000000e-01 : f32
    %49 = vector.broadcast %cst_29 : f32 to vector<8x64xf32>
    %50 = arith.mulf %49, %48 : vector<8x64xf32>
    %cst_30 = arith.constant 0.707106769 : f32
    %51 = vector.broadcast %cst_30 : f32 to vector<8x64xf32>
    %52 = arith.mulf %48, %51 : vector<8x64xf32>
    %53 = math.erf %52 : vector<8x64xf32>
    %cst_31 = arith.constant 1.000000e+00 : f32
    %54 = vector.broadcast %cst_31 : f32 to vector<8x64xf32>
    %55 = arith.addf %54, %53 : vector<8x64xf32>
    %56 = arith.mulf %50, %55 : vector<8x64xf32>
    %57 = arith.truncf %56 : vector<8x64xf32> to vector<8x64xbf16>
    %c0_32 = arith.constant 0 : index
    %c0_33 = arith.constant 0 : index
    %58 = vector.load %arg10[%c0_32, %c0_33] : memref<64x32xbf16, #tpu.memory_space<vmem>>, vector<64x32xbf16>
    %cst_34 = arith.constant dense<0.000000e+00> : vector<8x32xf32>
    %59 = tpu.matmul %57, %58, %cst_34 {dimension_numbers = #tpu.dot_dimension_numbers<[1], [0], [0], [1], [0, 0, 1, 1], [], []>} : vector<8x64xbf16>, vector<64x32xbf16>, vector<8x32xf32> -> vector<8x32xf32>
    %c0_35 = arith.constant 0 : index
    %c0_36 = arith.constant 0 : index
    %60 = vector.load %arg11[%c0_35, %c0_36] : memref<1x32xf32, #tpu.memory_space<vmem>>, vector<1x32xf32>
    %61 = vector.broadcast %60 : vector<1x32xf32> to vector<8x32xf32>
    %62 = arith.addf %59, %61 : vector<8x32xf32>
    %cst_37 = arith.constant 5.000000e-01 : f32
    %63 = vector.broadcast %cst_37 : f32 to vector<8x32xf32>
    %64 = arith.mulf %63, %62 : vector<8x32xf32>
    %cst_38 = arith.constant 0.707106769 : f32
    %65 = vector.broadcast %cst_38 : f32 to vector<8x32xf32>
    %66 = arith.mulf %62, %65 : vector<8x32xf32>
    %67 = math.erf %66 : vector<8x32xf32>
    %cst_39 = arith.constant 1.000000e+00 : f32
    %68 = vector.broadcast %cst_39 : f32 to vector<8x32xf32>
    %69 = arith.addf %68, %67 : vector<8x32xf32>
    %70 = arith.mulf %64, %69 : vector<8x32xf32>
    %71 = arith.truncf %70 : vector<8x32xf32> to vector<8x32xbf16>
    %c0_40 = arith.constant 0 : index
    %c0_41 = arith.constant 0 : index
    %72 = vector.load %arg12[%c0_40, %c0_41] : memref<32x128xbf16, #tpu.memory_space<vmem>>, vector<32x128xbf16>
    %cst_42 = arith.constant dense<0.000000e+00> : vector<8x128xf32>
    %73 = tpu.matmul %71, %72, %cst_42 {dimension_numbers = #tpu.dot_dimension_numbers<[1], [0], [0], [1], [0, 0, 1, 1], [], []>} : vector<8x32xbf16>, vector<32x128xbf16>, vector<8x128xf32> -> vector<8x128xf32>
    %c0_43 = arith.constant 0 : index
    %c0_44 = arith.constant 0 : index
    %74 = vector.load %arg13[%c0_43, %c0_44] : memref<1x128xf32, #tpu.memory_space<vmem>>, vector<1x128xf32>
    %75 = vector.broadcast %74 : vector<1x128xf32> to vector<8x128xf32>
    %76 = arith.addf %73, %75 : vector<8x128xf32>
    %c0_45 = arith.constant 0 : index
    %c0_46 = arith.constant 0 : index
    %77 = vector.load %arg14[%c0_45, %c0_46] : memref<8x128xf32, #tpu.memory_space<vmem>>, vector<8x128xf32>
    tpu.vector_store %arg14[%c0_45, %c0_46], %76 {strides = array<i32>} : memref<8x128xf32, #tpu.memory_space<vmem>>, vector<8x128xf32>,
    return
  }
  func.func @transform_0(%arg0: i32) -> (i32, i32) {
    %c0_i32 = arith.constant 0 : i32
    %c0_i32_0 = arith.constant 0 : i32
    return %arg0, %c0_i32 : i32, i32
  }
  func.func @transform_1(%arg0: i32) -> (i32, i32) {
    %c0_i32 = arith.constant 0 : i32
    %c0_i32_0 = arith.constant 0 : i32
    %c0_i32_1 = arith.constant 0 : i32
    return %c0_i32, %c0_i32_0 : i32, i32
  }
  func.func @transform_2(%arg0: i32) -> (i32, i32) {
    %c0_i32 = arith.constant 0 : i32
    %c0_i32_0 = arith.constant 0 : i32
    %c0_i32_1 = arith.constant 0 : i32
    return %c0_i32, %c0_i32_0 : i32, i32
  }
  func.func @transform_3(%arg0: i32) -> (i32, i32) {
    %c0_i32 = arith.constant 0 : i32
    %c0_i32_0 = arith.constant 0 : i32
    %c0_i32_1 = arith.constant 0 : i32
    return %c0_i32, %c0_i32_0 : i32, i32
  }
  func.func @transform_4(%arg0: i32) -> (i32, i32) {
    %c0_i32 = arith.constant 0 : i32
    %c0_i32_0 = arith.constant 0 : i32
    %c0_i32_1 = arith.constant 0 : i32
    return %c0_i32, %c0_i32_0 : i32, i32
  }
  func.func @transform_5(%arg0: i32) -> (i32, i32) {
    %c0_i32 = arith.constant 0 : i32
    %c0_i32_0 = arith.constant 0 : i32
    %c0_i32_1 = arith.constant 0 : i32
    return %c0_i32, %c0_i32_0 : i32, i32
  }
  func.func @transform_6(%arg0: i32) -> (i32, i32) {
    %c0_i32 = arith.constant 0 : i32
    %c0_i32_0 = arith.constant 0 : i32
    %c0_i32_1 = arith.constant 0 : i32
    return %c0_i32, %c0_i32_0 : i32, i32
  }
  func.func @transform_7(%arg0: i32) -> (i32, i32) {
    %c0_i32 = arith.constant 0 : i32
    %c0_i32_0 = arith.constant 0 : i32
    %c0_i32_1 = arith.constant 0 : i32
    return %c0_i32, %c0_i32_0 : i32, i32
  }
  func.func @transform_8(%arg0: i32) -> (i32, i32) {
    %c0_i32 = arith.constant 0 : i32
    %c0_i32_0 = arith.constant 0 : i32
    %c0_i32_1 = arith.constant 0 : i32
    return %c0_i32, %c0_i32_0 : i32, i32
  }
  func.func @transform_9(%arg0: i32) -> (i32, i32) {
    %c0_i32 = arith.constant 0 : i32
    %c0_i32_0 = arith.constant 0 : i32
    %c0_i32_1 = arith.constant 0 : i32
    return %c0_i32, %c0_i32_0 : i32, i32
  }
  func.func @transform_10(%arg0: i32) -> (i32, i32) {
    %c0_i32 = arith.constant 0 : i32
    %c0_i32_0 = arith.constant 0 : i32
    %c0_i32_1 = arith.constant 0 : i32
    return %c0_i32, %c0_i32_0 : i32, i32
  }
  func.func @transform_11(%arg0: i32) -> (i32, i32) {
    %c0_i32 = arith.constant 0 : i32
    %c0_i32_0 = arith.constant 0 : i32
    %c0_i32_1 = arith.constant 0 : i32
    return %c0_i32, %c0_i32_0 : i32, i32
  }
  func.func @transform_12(%arg0: i32) -> (i32, i32) {
    %c0_i32 = arith.constant 0 : i32
    %c0_i32_0 = arith.constant 0 : i32
    %c0_i32_1 = arith.constant 0 : i32
    return %c0_i32, %c0_i32_0 : i32, i32
  }
  func.func @transform_13(%arg0: i32) -> (i32, i32) {
    %c0_i32 = arith.constant 0 : i32
    %c0_i32_0 = arith.constant 0 : i32
    return %arg0, %c0_i32 : i32, i32
  }
}

</mosaic_0001>

<llo_original>
// kernel: _lambda_.1
$region0: #{_lambda_.1}
  #allocation0 [shape = 'u32[]', space=smem, size = 0x4, offset = 0x4, fixed_abs, tag = 'smem constant byte address 0x4 - core index']
  #allocation1 [shape = 'u32[144,128]{1,0:T(1,128)}', space=vmem, size = 0x12000, scoped, tag = 'internal scratch']
  %s0 = inlined_call_operand.vmem [shape: f32[8,128], index: 0, kind: input, shape index: {}]
  %s1 = inlined_call_operand.vmem [shape: bf16[128,512], index: 1, kind: input, shape index: {}]
  %s2 = inlined_call_operand.vmem [shape: f32[1,512], index: 2, kind: input, shape index: {}]
  %s3 = inlined_call_operand.vmem [shape: bf16[512,256], index: 3, kind: input, shape index: {}]
  %s4 = inlined_call_operand.vmem [shape: f32[1,256], index: 4, kind: input, shape index: {}]
  %s5 = inlined_call_operand.vmem [shape: bf16[256,128], index: 5, kind: input, shape index: {}]
  %s6 = inlined_call_operand.vmem [shape: f32[1,128], index: 6, kind: input, shape index: {}]
  %s7 = inlined_call_operand.vmem [shape: bf16[128,64], index: 7, kind: input, shape index: {}]
  %s8 = inlined_call_operand.vmem [shape: f32[1,64], index: 8, kind: input, shape index: {}]
  %s9 = inlined_call_operand.vmem [shape: bf16[64,32], index: 9, kind: input, shape index: {}]
  %s10 = inlined_call_operand.vmem [shape: f32[1,32], index: 10, kind: input, shape index: {}]
  %s11 = inlined_call_operand.vmem [shape: bf16[32,128], index: 11, kind: input, shape index: {}]
  %s12 = inlined_call_operand.vmem [shape: f32[1,128], index: 12, kind: input, shape index: {}]
  %s13 = inlined_call_operand.vmem [shape: f32[8,128], index: 13, kind: output, shape index: {}]
  %s14 = sld [smem:[#allocation0]]
  $region62: #{_lambda_.1} parent=0
    _
  %s16 = ssub.s32 1, %s14
  %s17 = scalar_select 0, %s16, %s14
  // Predicated region
  $region2: #{_lambda_.1} parent=0 // pred_check
    _
  $region3: #{_lambda_.1} parent=0 // pred_check_branch
    %19 = sbr.rel (0) target = $region5
  $region4: #{_lambda_.1} parent=0 // pred_region
    _
  $region5: #{_lambda_.1} parent=0 // pred_fallthru
    _
  // Predicated region
  $region6: #{_lambda_.1} parent=0 // pred_check
    _
  $region7: #{_lambda_.1} parent=0 // pred_check_branch
    %21 = sbr.rel (0) target = $region9
  $region8: #{_lambda_.1} parent=0 // pred_region
    _
  $region9: #{_lambda_.1} parent=0 // pred_fallthru
    _
  // Predicated region
  $region10: #{_lambda_.1} parent=0 // pred_check
    _
  $region11: #{_lambda_.1} parent=0 // pred_check_branch
    %23 = sbr.rel (0) target = $region13
  $region12: #{_lambda_.1} parent=0 // pred_region
    _
  $region13: #{_lambda_.1} parent=0 // pred_fallthru
    _
  // Predicated region
  $region14: #{_lambda_.1} parent=0 // pred_check
    _
  $region15: #{_lambda_.1} parent=0 // pred_check_branch
    %25 = sbr.rel (0) target = $region17
  $region16: #{_lambda_.1} parent=0 // pred_region
    _
  $region17: #{_lambda_.1} parent=0 // pred_fallthru
    _
  // Predicated region
  $region18: #{_lambda_.1} parent=0 // pred_check
    _
  $region19: #{_lambda_.1} parent=0 // pred_check_branch
    %27 = sbr.rel (0) target = $region21
  $region20: #{_lambda_.1} parent=0 // pred_region
    _
  $region21: #{_lambda_.1} parent=0 // pred_fallthru
    _
  // Predicated region
  $region22: #{_lambda_.1} parent=0 // pred_check
    _
  $region23: #{_lambda_.1} parent=0 // pred_check_branch
    %29 = sbr.rel (0) target = $region25
  $region24: #{_lambda_.1} parent=0 // pred_region
    _
  $region25: #{_lambda_.1} parent=0 // pred_fallthru
    _
  // Predicated region
  $region26: #{_lambda_.1} parent=0 // pred_check
    _
  $region27: #{_lambda_.1} parent=0 // pred_check_branch
    %31 = sbr.rel (0) target = $region29
  $region28: #{_lambda_.1} parent=0 // pred_region
    _
  $region29: #{_lambda_.1} parent=0 // pred_fallthru
    _
  // Predicated region
  $region30: #{_lambda_.1} parent=0 // pred_check
    _
  $region31: #{_lambda_.1} parent=0 // pred_check_branch
    %33 = sbr.rel (0) target = $region33
  $region32: #{_lambda_.1} parent=0 // pred_region
    _
  $region33: #{_lambda_.1} parent=0 // pred_fallthru
    _
  // Predicated region
  $region34: #{_lambda_.1} parent=0 // pred_check
    _
  $region35: #{_lambda_.1} parent=0 // pred_check_branch
    %35 = sbr.rel (0) target = $region37
  $region36: #{_lambda_.1} parent=0 // pred_region
    _
  $region37: #{_lambda_.1} parent=0 // pred_fallthru
    _
  // Predicated region
  $region38: #{_lambda_.1} parent=0 // pred_check
    _
  $region39: #{_lambda_.1} parent=0 // pred_check_branch
    %37 = sbr.rel (0) target = $region41
  $region40: #{_lambda_.1} parent=0 // pred_region
    _
  $region41: #{_lambda_.1} parent=0 // pred_fallthru
    _
  // Predicated region
  $region42: #{_lambda_.1} parent=0 // pred_check
    _
  $region43: #{_lambda_.1} parent=0 // pred_check_branch
    %39 = sbr.rel (0) target = $region45
  $region44: #{_lambda_.1} parent=0 // pred_region
    _
  $region45: #{_lambda_.1} parent=0 // pred_fallthru
    _
  // Predicated region
  $region46: #{_lambda_.1} parent=0 // pred_check
    _
  $region47: #{_lambda_.1} parent=0 // pred_check_branch
    %41 = sbr.rel (0) target = $region49
  $region48: #{_lambda_.1} parent=0 // pred_region
    _
  $region49: #{_lambda_.1} parent=0 // pred_fallthru
    _
  // Predicated region
  $region50: #{_lambda_.1} parent=0 // pred_check
    _
  $region51: #{_lambda_.1} parent=0 // pred_check_branch
    %43 = sbr.rel (0) target = $region53
  $region52: #{_lambda_.1} parent=0 // pred_region
    _
  $region53: #{_lambda_.1} parent=0 // pred_fallthru
    _
  %v45 = vld [vmem:[%s0] sm:$0xff]
  %v46 = vpack.c.bf16 %v45, %v45
  %v47 = vld [vmem:[%s1] sm:$0xff]
  %v48 = vld [vmem:[%s1 + $0x8] sm:$0xff]
  %v49 = vld [vmem:[%s1 + $0x10] sm:$0xff]
  %v50 = vld [vmem:[%s1 + $0x18] sm:$0xff]
  %v51 = vld [vmem:[%s1 + $0x20] sm:$0xff]
  %v52 = vld [vmem:[%s1 + $0x28] sm:$0xff]
  %v53 = vld [vmem:[%s1 + $0x30] sm:$0xff]
  %v54 = vld [vmem:[%s1 + $0x38] sm:$0xff]
  %v55 = vld [vmem:[%s1 + $0x40] sm:$0xff]
  %v56 = vld [vmem:[%s1 + $0x48] sm:$0xff]
  %v57 = vld [vmem:[%s1 + $0x50] sm:$0xff]
  %v58 = vld [vmem:[%s1 + $0x58] sm:$0xff]
  %v59 = vld [vmem:[%s1 + $0x60] sm:$0xff]
  %v60 = vld [vmem:[%s1 + $0x68] sm:$0xff]
  %v61 = vld [vmem:[%s1 + $0x70] sm:$0xff]
  %v62 = vld [vmem:[%s1 + $0x78] sm:$0xff]
  %v63 = vld [vmem:[%s1 + $0x80] sm:$0xff]
  %v64 = vld [vmem:[%s1 + $0x88] sm:$0xff]
  %v65 = vld [vmem:[%s1 + $0x90] sm:$0xff]
  %v66 = vld [vmem:[%s1 + $0x98] sm:$0xff]
  %v67 = vld [vmem:[%s1 + $0xa0] sm:$0xff]
  %v68 = vld [vmem:[%s1 + $0xa8] sm:$0xff]
  %v69 = vld [vmem:[%s1 + $0xb0] sm:$0xff]
  %v70 = vld [vmem:[%s1 + $0xb8] sm:$0xff]
  %v71 = vld [vmem:[%s1 + $0xc0] sm:$0xff]
  %v72 = vld [vmem:[%s1 + $0xc8] sm:$0xff]
  %v73 = vld [vmem:[%s1 + $0xd0] sm:$0xff]
  %v74 = vld [vmem:[%s1 + $0xd8] sm:$0xff]
  %v75 = vld [vmem:[%s1 + $0xe0] sm:$0xff]
  %v76 = vld [vmem:[%s1 + $0xe8] sm:$0xff]
  %v77 = vld [vmem:[%s1 + $0xf0] sm:$0xff]
  %v78 = vld [vmem:[%s1 + $0xf8] sm:$0xff]
  %v79 = vld [vmem:[%s2] sm:$0xf]
  %v81 = vlaneseq
  %v82 = vshrl.u32 %v81, 7
  %v83 = vsub.s32 0, %v82
  %v84 = vrot.slane %v79, %v83
  %v85 = vlaneseq
  %v86 = vshrl.u32 %v85, 7
  %v87 = vsub.s32 1, %v86
  %v88 = vrot.slane %v79, %v87
  %v89 = vlaneseq
  %v90 = vshrl.u32 %v89, 7
  %v91 = vsub.s32 2, %v90
  %v92 = vrot.slane %v79, %v91
  %v93 = vlaneseq
  %v94 = vshrl.u32 %v93, 7
  %v95 = vsub.s32 3, %v94
  %v96 = vrot.slane %v79, %v95
  %v133 = vunpack.c.l.b16 %v47
  %v134 = vunpack.c.h.b16 %v47
  %v135 = vunpack.c.l.b16 %v48
  %v136 = vunpack.c.h.b16 %v48
  %v137 = vunpack.c.l.b16 %v49
  %v138 = vunpack.c.h.b16 %v49
  %v139 = vunpack.c.l.b16 %v50
  %v140 = vunpack.c.h.b16 %v50
  %v141 = vunpack.c.l.b16 %v51
  %v142 = vunpack.c.h.b16 %v51
  %v143 = vunpack.c.l.b16 %v52
  %v144 = vunpack.c.h.b16 %v52
  %v145 = vunpack.c.l.b16 %v53
  %v146 = vunpack.c.h.b16 %v53
  %v147 = vunpack.c.l.b16 %v54
  %v148 = vunpack.c.h.b16 %v54
  %v149 = vunpack.c.l.b16 %v55
  %v150 = vunpack.c.h.b16 %v55
  %v151 = vunpack.c.l.b16 %v56
  %v152 = vunpack.c.h.b16 %v56
  %v153 = vunpack.c.l.b16 %v57
  %v154 = vunpack.c.h.b16 %v57
  %v155 = vunpack.c.l.b16 %v58
  %v156 = vunpack.c.h.b16 %v58
  %v157 = vunpack.c.l.b16 %v59
  %v158 = vunpack.c.h.b16 %v59
  %v159 = vunpack.c.l.b16 %v60
  %v160 = vunpack.c.h.b16 %v60
  %v161 = vunpack.c.l.b16 %v61
  %v162 = vunpack.c.h.b16 %v61
  %v163 = vunpack.c.l.b16 %v62
  %v164 = vunpack.c.h.b16 %v62
  %v165 = vunpack.c.l.b16 %v63
  %v166 = vunpack.c.h.b16 %v63
  %v167 = vunpack.c.l.b16 %v64
  %v168 = vunpack.c.h.b16 %v64
  %v169 = vunpack.c.l.b16 %v65
  %v170 = vunpack.c.h.b16 %v65
  %v171 = vunpack.c.l.b16 %v66
  %v172 = vunpack.c.h.b16 %v66
  %v173 = vunpack.c.l.b16 %v67
  %v174 = vunpack.c.h.b16 %v67
  %v175 = vunpack.c.l.b16 %v68
  %v176 = vunpack.c.h.b16 %v68
  %v177 = vunpack.c.l.b16 %v69
  %v178 = vunpack.c.h.b16 %v69
  %v179 = vunpack.c.l.b16 %v70
  %v180 = vunpack.c.h.b16 %v70
  %v181 = vunpack.c.l.b16 %v71
  %v182 = vunpack.c.h.b16 %v71
  %v183 = vunpack.c.l.b16 %v72
  %v184 = vunpack.c.h.b16 %v72
  %v185 = vunpack.c.l.b16 %v73
  %v186 = vunpack.c.h.b16 %v73
  %v187 = vunpack.c.l.b16 %v74
  %v188 = vunpack.c.h.b16 %v74
  %v189 = vunpack.c.l.b16 %v75
  %v190 = vunpack.c.h.b16 %v75
  %v191 = vunpack.c.l.b16 %v76
  %v192 = vunpack.c.h.b16 %v76
  %v193 = vunpack.c.l.b16 %v77
  %v194 = vunpack.c.h.b16 %v77
  %v195 = vunpack.c.l.b16 %v78
  %v196 = vunpack.c.h.b16 %v78
  %v197 = vpack.c.b16 %v137, %v133
  %v198 = vpack.c.b16 %v138, %v134
  %v199 = vpack.c.b16 %v139, %v135
  %v200 = vpack.c.b16 %v140, %v136
  %v201 = vpack.c.b16 %v145, %v141
  %v202 = vpack.c.b16 %v146, %v142
  %v203 = vpack.c.b16 %v147, %v143
  %v204 = vpack.c.b16 %v148, %v144
  %v205 = vpack.c.b16 %v153, %v149
  %v206 = vpack.c.b16 %v154, %v150
  %v207 = vpack.c.b16 %v155, %v151
  %v208 = vpack.c.b16 %v156, %v152
  %v209 = vpack.c.b16 %v161, %v157
  %v210 = vpack.c.b16 %v162, %v158
  %v211 = vpack.c.b16 %v163, %v159
  %v212 = vpack.c.b16 %v164, %v160
  %v213 = vpack.c.b16 %v169, %v165
  %v214 = vpack.c.b16 %v170, %v166
  %v215 = vpack.c.b16 %v171, %v167
  %v216 = vpack.c.b16 %v172, %v168
  %v217 = vpack.c.b16 %v177, %v173
  %v218 = vpack.c.b16 %v178, %v174
  %v219 = vpack.c.b16 %v179, %v175
  %v220 = vpack.c.b16 %v180, %v176
  %v221 = vpack.c.b16 %v185, %v181
  %v222 = vpack.c.b16 %v186, %v182
  %v223 = vpack.c.b16 %v187, %v183
  %v224 = vpack.c.b16 %v188, %v184
  %v225 = vpack.c.b16 %v193, %v189
  %v226 = vpack.c.b16 %v194, %v190
  %v227 = vpack.c.b16 %v195, %v191
  %v228 = vpack.c.b16 %v196, %v192
  %261 = vmatprep.subr.bf16.mxu0 %v198
  %262 = vmatpush1.bf16.msra.mxu0 %v197
  %263 = vmatprep.subr.bf16.mxu0 %v202
  %264 = vmatpush1.bf16.msra.mxu0 %v201
  %265 = vmatprep.subr.bf16.mxu0 %v206
  %266 = vmatpush1.bf16.msra.mxu0 %v205
  %267 = vmatprep.subr.bf16.mxu0 %v210
  %268 = vmatpush1.bf16.msra.mxu0 %v209
  %269 = vmatprep.subr.bf16.mxu0 %v214
  %270 = vmatpush1.bf16.msra.mxu0 %v213
  %271 = vmatprep.subr.bf16.mxu0 %v218
  %272 = vmatpush1.bf16.msra.mxu0 %v217
  %273 = vmatprep.subr.bf16.mxu0 %v222
  %274 = vmatpush1.bf16.msra.mxu0 %v221
  %275 = vmatprep.subr.bf16.mxu0 %v226
  %276 = vmatpush1.bf16.msra.mxu0 %v225
  %277 = vmatprep.subr.bf16.mxu0 0
  %278 = vmatpush1.bf16.msra.mxu0 0
  %279 = vmatprep.subr.bf16.mxu0 0
  %280 = vmatpush1.bf16.msra.mxu0 0
  %281 = vmatprep.subr.bf16.mxu0 0
  %282 = vmatpush1.bf16.msra.mxu0 0
  %283 = vmatprep.subr.bf16.mxu0 0
  %284 = vmatpush1.bf16.msra.mxu0 0
  %285 = vmatprep.subr.bf16.mxu0 0
  %286 = vmatpush1.bf16.msra.mxu0 0
  %287 = vmatprep.subr.bf16.mxu0 0
  %288 = vmatpush1.bf16.msra.mxu0 0
  %289 = vmatprep.subr.bf16.mxu0 0
  %290 = vmatpush1.bf16.msra.mxu0 0
  %291 = vmatprep.subr.bf16.mxu0 0
  %292 = vmatpush1.bf16.msra.mxu0 0
  %293 = vmatprep.mubr.bf16.mxu0 0
  %294 = vmatmul.mubr.bf16.gmra.mrb[0].mxu0 %v46
  %v295 = vpop.f32.mrb[0].mxu0
  %v296 = vadd.f32 %v84, %v295
  %v297 = vpop.f32.mrb[0].mxu0
  %v298 = vadd.f32 %v88, %v297
  %v299 = vpop.f32.mrb[0].mxu0
  %v300 = vpop.f32.mrb[0].mxu0
  %301 = vdwg.mxu0
  %302 = vmatprep.subr.bf16.mxu0 %v200
  %303 = vmatpush1.bf16.msra.mxu0 %v199
  %304 = vmatprep.subr.bf16.mxu0 %v204
  %305 = vmatpush1.bf16.msra.mxu0 %v203
  %306 = vmatprep.subr.bf16.mxu0 %v208
  %307 = vmatpush1.bf16.msra.mxu0 %v207
  %308 = vmatprep.subr.bf16.mxu0 %v212
  %309 = vmatpush1.bf16.msra.mxu0 %v211
  %310 = vmatprep.subr.bf16.mxu0 %v216
  %311 = vmatpush1.bf16.msra.mxu0 %v215
  %312 = vmatprep.subr.bf16.mxu0 %v220
  %313 = vmatpush1.bf16.msra.mxu0 %v219
  %314 = vmatprep.subr.bf16.mxu0 %v224
  %315 = vmatpush1.bf16.msra.mxu0 %v223
  %316 = vmatprep.subr.bf16.mxu0 %v228
  %317 = vmatpush1.bf16.msra.mxu0 %v227
  %318 = vmatprep.subr.bf16.mxu0 0
  %319 = vmatpush1.bf16.msra.mxu0 0
  %320 = vmatprep.subr.bf16.mxu0 0
  %321 = vmatpush1.bf16.msra.mxu0 0
  %322 = vmatprep.subr.bf16.mxu0 0
  %323 = vmatpush1.bf16.msra.mxu0 0
  %324 = vmatprep.subr.bf16.mxu0 0
  %325 = vmatpush1.bf16.msra.mxu0 0
  %326 = vmatprep.subr.bf16.mxu0 0
  %327 = vmatpush1.bf16.msra.mxu0 0
  %328 = vmatprep.subr.bf16.mxu0 0
  %329 = vmatpush1.bf16.msra.mxu0 0
  %330 = vmatprep.subr.bf16.mxu0 0
  %331 = vmatpush1.bf16.msra.mxu0 0
  %332 = vmatprep.subr.bf16.mxu0 0
  %333 = vmatpush1.bf16.msra.mxu0 0
  %334 = vmatprep.mubr.bf16.mxu0 0
  %335 = vmatmul.mubr.bf16.gmra.mrb[0].mxu0 %v46
  %v336 = vpop.f32.mrb[0].mxu0
  %v337 = vadd.f32 %v92, %v336
  %v338 = vpop.f32.mrb[0].mxu0
  %v339 = vadd.f32 %v96, %v338
  %v340 = vpop.f32.mrb[0].mxu0
  %v341 = vpop.f32.mrb[0].mxu0
  %342 = vdwg.mxu0
  %v343 = vmul.f32 %v296, 0.5
  %v344 = vmul.f32 %v298, 0.5
  %v345 = vmul.f32 %v337, 0.5
  %v346 = vmul.f32 %v339, 0.5
  %v347 = vmul.f32 %v296, 0.70710677
  %v348 = vmul.f32 %v298, 0.70710677
  %v349 = vmul.f32 %v337, 0.70710677
  %v350 = vmul.f32 %v339, 0.70710677
  %v351 = verf.f32.pop %v347
  %v352 = verf.f32.pop %v348
  %v353 = verf.f32.pop %v349
  %v354 = verf.f32.pop %v350
  %v355 = vadd.f32 %v351, 1.0
  %v356 = vadd.f32 %v352, 1.0
  %v357 = vadd.f32 %v353, 1.0
  %v358 = vadd.f32 %v354, 1.0
  %v359 = vmul.f32 %v343, %v355
  %v360 = vmul.f32 %v344, %v356
  %v361 = vmul.f32 %v345, %v357
  %v362 = vmul.f32 %v346, %v358
  %v363 = vpack.c.bf16 %v359, %v359
  %v364 = vpack.c.bf16 %v360, %v360
  %v365 = vpack.c.bf16 %v361, %v361
  %v366 = vpack.c.bf16 %v362, %v362
  %v367 = vld [vmem:[%s3] sm:$0xff]
  %v368 = vld [vmem:[%s3 + $0x8] sm:$0xff]
  %v369 = vld [vmem:[%s3 + $0x10] sm:$0xff]
  %v370 = vld [vmem:[%s3 + $0x18] sm:$0xff]
  %v371 = vld [vmem:[%s3 + $0x20] sm:$0xff]
  %v372 = vld [vmem:[%s3 + $0x28] sm:$0xff]
  %v373 = vld [vmem:[%s3 + $0x30] sm:$0xff]
  %v374 = vld [vmem:[%s3 + $0x38] sm:$0xff]
  %v375 = vld [vmem:[%s3 + $0x40] sm:$0xff]
  %v376 = vld [vmem:[%s3 + $0x48] sm:$0xff]
  %v377 = vld [vmem:[%s3 + $0x50] sm:$0xff]
  %v378 = vld [vmem:[%s3 + $0x58] sm:$0xff]
  %v379 = vld [vmem:[%s3 + $0x60] sm:$0xff]
  %v380 = vld [vmem:[%s3 + $0x68] sm:$0xff]
  %v381 = vld [vmem:[%s3 + $0x70] sm:$0xff]
  %v382 = vld [vmem:[%s3 + $0x78] sm:$0xff]
  %v383 = vld [vmem:[%s3 + $0x80] sm:$0xff]
  %v384 = vld [vmem:[%s3 + $0x88] sm:$0xff]
  %v385 = vld [vmem:[%s3 + $0x90] sm:$0xff]
  %v386 = vld [vmem:[%s3 + $0x98] sm:$0xff]
  %v387 = vld [vmem:[%s3 + $0xa0] sm:$0xff]
  %v388 = vld [vmem:[%s3 + $0xa8] sm:$0xff]
  %v389 = vld [vmem:[%s3 + $0xb0] sm:$0xff]
  %v390 = vld [vmem:[%s3 + $0xb8] sm:$0xff]
  %v391 = vld [vmem:[%s3 + $0xc0] sm:$0xff]
  %v392 = vld [vmem:[%s3 + $0xc8] sm:$0xff]
  %v393 = vld [vmem:[%s3 + $0xd0] sm:$0xff]
  %v394 = vld [vmem:[%s3 + $0xd8] sm:$0xff]
  %v395 = vld [vmem:[%s3 + $0xe0] sm:$0xff]
  %v396 = vld [vmem:[%s3 + $0xe8] sm:$0xff]
  %v397 = vld [vmem:[%s3 + $0xf0] sm:$0xff]
  %v398 = vld [vmem:[%s3 + $0xf8] sm:$0xff]
  %v399 = vld [vmem:[%s3 + $0x100] sm:$0xff]
  %v400 = vld [vmem:[%s3 + $0x108] sm:$0xff]
  %v401 = vld [vmem:[%s3 + $0x110] sm:$0xff]
  %v402 = vld [vmem:[%s3 + $0x118] sm:$0xff]
  %v403 = vld [vmem:[%s3 + $0x120] sm:$0xff]
  %v404 = vld [vmem:[%s3 + $0x128] sm:$0xff]
  %v405 = vld [vmem:[%s3 + $0x130] sm:$0xff]
  %v406 = vld [vmem:[%s3 + $0x138] sm:$0xff]
  %v407 = vld [vmem:[%s3 + $0x140] sm:$0xff]
  %v408 = vld [vmem:[%s3 + $0x148] sm:$0xff]
  %v409 = vld [vmem:[%s3 + $0x150] sm:$0xff]
  %v410 = vld [vmem:[%s3 + $0x158] sm:$0xff]
  %v411 = vld [vmem:[%s3 + $0x160] sm:$0xff]
  %v412 = vld [vmem:[%s3 + $0x168] sm:$0xff]
  %v413 = vld [vmem:[%s3 + $0x170] sm:$0xff]
  %v414 = vld [vmem:[%s3 + $0x178] sm:$0xff]
  %v415 = vld [vmem:[%s3 + $0x180] sm:$0xff]
  %v416 = vld [vmem:[%s3 + $0x188] sm:$0xff]
  %v417 = vld [vmem:[%s3 + $0x190] sm:$0xff]
  %v418 = vld [vmem:[%s3 + $0x198] sm:$0xff]
  %v419 = vld [vmem:[%s3 + $0x1a0] sm:$0xff]
  %v420 = vld [vmem:[%s3 + $0x1a8] sm:$0xff]
  %v421 = vld [vmem:[%s3 + $0x1b0] sm:$0xff]
  %v422 = vld [vmem:[%s3 + $0x1b8] sm:$0xff]
  %v423 = vld [vmem:[%s3 + $0x1c0] sm:$0xff]
  %v424 = vld [vmem:[%s3 + $0x1c8] sm:$0xff]
  %v425 = vld [vmem:[%s3 + $0x1d0] sm:$0xff]
  %v426 = vld [vmem:[%s3 + $0x1d8] sm:$0xff]
  %v427 = vld [vmem:[%s3 + $0x1e0] sm:$0xff]
  %v428 = vld [vmem:[%s3 + $0x1e8] sm:$0xff]
  %v429 = vld [vmem:[%s3 + $0x1f0] sm:$0xff]
  %v430 = vld [vmem:[%s3 + $0x1f8] sm:$0xff]
  %v431 = vld [vmem:[%s4] sm:$0x3]
  %v433 = vlaneseq
  %v434 = vshrl.u32 %v433, 7
  %v435 = vsub.s32 0, %v434
  %v436 = vrot.slane %v431, %v435
  %v437 = vlaneseq
  %v438 = vshrl.u32 %v437, 7
  %v439 = vsub.s32 1, %v438
  %v440 = vrot.slane %v431, %v439
  %v507 = vunpack.c.l.b16 %v367
  %v508 = vunpack.c.h.b16 %v367
  %v509 = vunpack.c.l.b16 %v368
  %v510 = vunpack.c.h.b16 %v368
  %v511 = vunpack.c.l.b16 %v369
  %v512 = vunpack.c.h.b16 %v369
  %v513 = vunpack.c.l.b16 %v370
  %v514 = vunpack.c.h.b16 %v370
  %v515 = vunpack.c.l.b16 %v371
  %v516 = vunpack.c.h.b16 %v371
  %v517 = vunpack.c.l.b16 %v372
  %v518 = vunpack.c.h.b16 %v372
  %v519 = vunpack.c.l.b16 %v373
  %v520 = vunpack.c.h.b16 %v373
  %v521 = vunpack.c.l.b16 %v374
  %v522 = vunpack.c.h.b16 %v374
  %v523 = vunpack.c.l.b16 %v375
  %v524 = vunpack.c.h.b16 %v375
  %v525 = vunpack.c.l.b16 %v376
  %v526 = vunpack.c.h.b16 %v376
  %v527 = vunpack.c.l.b16 %v377
  %v528 = vunpack.c.h.b16 %v377
  %v529 = vunpack.c.l.b16 %v378
  %v530 = vunpack.c.h.b16 %v378
  %v531 = vunpack.c.l.b16 %v379
  %v532 = vunpack.c.h.b16 %v379
  %v533 = vunpack.c.l.b16 %v380
  %v534 = vunpack.c.h.b16 %v380
  %v535 = vunpack.c.l.b16 %v381
  %v536 = vunpack.c.h.b16 %v381
  %v537 = vunpack.c.l.b16 %v382
  %v538 = vunpack.c.h.b16 %v382
  %v539 = vunpack.c.l.b16 %v383
  %v540 = vunpack.c.h.b16 %v383
  %v541 = vunpack.c.l.b16 %v384
  %v542 = vunpack.c.h.b16 %v384
  %v543 = vunpack.c.l.b16 %v385
  %v544 = vunpack.c.h.b16 %v385
  %v545 = vunpack.c.l.b16 %v386
  %v546 = vunpack.c.h.b16 %v386
  %v547 = vunpack.c.l.b16 %v387
  %v548 = vunpack.c.h.b16 %v387
  %v549 = vunpack.c.l.b16 %v388
  %v550 = vunpack.c.h.b16 %v388
  %v551 = vunpack.c.l.b16 %v389
  %v552 = vunpack.c.h.b16 %v389
  %v553 = vunpack.c.l.b16 %v390
  %v554 = vunpack.c.h.b16 %v390
  %v555 = vunpack.c.l.b16 %v391
  %v556 = vunpack.c.h.b16 %v391
  %v557 = vunpack.c.l.b16 %v392
  %v558 = vunpack.c.h.b16 %v392
  %v559 = vunpack.c.l.b16 %v393
  %v560 = vunpack.c.h.b16 %v393
  %v561 = vunpack.c.l.b16 %v394
  %v562 = vunpack.c.h.b16 %v394
  %v563 = vunpack.c.l.b16 %v395
  %v564 = vunpack.c.h.b16 %v395
  %v565 = vunpack.c.l.b16 %v396
  %v566 = vunpack.c.h.b16 %v396
  %v567 = vunpack.c.l.b16 %v397
  %v568 = vunpack.c.h.b16 %v397
  %v569 = vunpack.c.l.b16 %v398
  %v570 = vunpack.c.h.b16 %v398
  %v571 = vunpack.c.l.b16 %v399
  %v572 = vunpack.c.h.b16 %v399
  %v573 = vunpack.c.l.b16 %v400
  %v574 = vunpack.c.h.b16 %v400
  %v575 = vunpack.c.l.b16 %v401
  %v576 = vunpack.c.h.b16 %v401
  %v577 = vunpack.c.l.b16 %v402
  %v578 = vunpack.c.h.b16 %v402
  %v579 = vunpack.c.l.b16 %v403
  %v580 = vunpack.c.h.b16 %v403
  %v581 = vunpack.c.l.b16 %v404
  %v582 = vunpack.c.h.b16 %v404
  %v583 = vunpack.c.l.b16 %v405
  %v584 = vunpack.c.h.b16 %v405
  %v585 = vunpack.c.l.b16 %v406
  %v586 = vunpack.c.h.b16 %v406
  %v587 = vunpack.c.l.b16 %v407
  %v588 = vunpack.c.h.b16 %v407
  %v589 = vunpack.c.l.b16 %v408
  %v590 = vunpack.c.h.b16 %v408
  %v591 = vunpack.c.l.b16 %v409
  %v592 = vunpack.c.h.b16 %v409
  %v593 = vunpack.c.l.b16 %v410
  %v594 = vunpack.c.h.b16 %v410
  %v595 = vunpack.c.l.b16 %v411
  %v596 = vunpack.c.h.b16 %v411
  %v597 = vunpack.c.l.b16 %v412
  %v598 = vunpack.c.h.b16 %v412
  %v599 = vunpack.c.l.b16 %v413
  %v600 = vunpack.c.h.b16 %v413
  %v601 = vunpack.c.l.b16 %v414
  %v602 = vunpack.c.h.b16 %v414
  %v603 = vunpack.c.l.b16 %v415
  %v604 = vunpack.c.h.b16 %v415
  %v605 = vunpack.c.l.b16 %v416
  %v606 = vunpack.c.h.b16 %v416
  %v607 = vunpack.c.l.b16 %v417
  %v608 = vunpack.c.h.b16 %v417
  %v609 = vunpack.c.l.b16 %v418
  %v610 = vunpack.c.h.b16 %v418
  %v611 = vunpack.c.l.b16 %v419
  %v612 = vunpack.c.h.b16 %v419
  %v613 = vunpack.c.l.b16 %v420
  %v614 = vunpack.c.h.b16 %v420
  %v615 = vunpack.c.l.b16 %v421
  %v616 = vunpack.c.h.b16 %v421
  %v617 = vunpack.c.l.b16 %v422
  %v618 = vunpack.c.h.b16 %v422
  %v619 = vunpack.c.l.b16 %v423
  %v620 = vunpack.c.h.b16 %v423
  %v621 = vunpack.c.l.b16 %v424
  %v622 = vunpack.c.h.b16 %v424
  %v623 = vunpack.c.l.b16 %v425
  %v624 = vunpack.c.h.b16 %v425
  %v625 = vunpack.c.l.b16 %v426
  %v626 = vunpack.c.h.b16 %v426
  %v627 = vunpack.c.l.b16 %v427
  %v628 = vunpack.c.h.b16 %v427
  %v629 = vunpack.c.l.b16 %v428
  %v630 = vunpack.c.h.b16 %v428
  %v631 = vunpack.c.l.b16 %v429
  %v632 = vunpack.c.h.b16 %v429
  %v633 = vunpack.c.l.b16 %v430
  %v634 = vunpack.c.h.b16 %v430
  %v635 = vpack.c.b16 %v509, %v507
  %v636 = vpack.c.b16 %v510, %v508
  %v637 = vpack.c.b16 %v513, %v511
  %v638 = vpack.c.b16 %v514, %v512
  %v639 = vpack.c.b16 %v517, %v515
  %v640 = vpack.c.b16 %v518, %v516
  %v641 = vpack.c.b16 %v521, %v519
  %v642 = vpack.c.b16 %v522, %v520
  %v643 = vpack.c.b16 %v525, %v523
  %v644 = vpack.c.b16 %v526, %v524
  %v645 = vpack.c.b16 %v529, %v527
  %v646 = vpack.c.b16 %v530, %v528
  %v647 = vpack.c.b16 %v533, %v531
  %v648 = vpack.c.b16 %v534, %v532
  %v649 = vpack.c.b16 %v537, %v535
  %v650 = vpack.c.b16 %v538, %v536
  %v651 = vpack.c.b16 %v541, %v539
  %v652 = vpack.c.b16 %v542, %v540
  %v653 = vpack.c.b16 %v545, %v543
  %v654 = vpack.c.b16 %v546, %v544
  %v655 = vpack.c.b16 %v549, %v547
  %v656 = vpack.c.b16 %v550, %v548
  %v657 = vpack.c.b16 %v553, %v551
  %v658 = vpack.c.b16 %v554, %v552
  %v659 = vpack.c.b16 %v557, %v555
  %v660 = vpack.c.b16 %v558, %v556
  %v661 = vpack.c.b16 %v561, %v559
  %v662 = vpack.c.b16 %v562, %v560
  %v663 = vpack.c.b16 %v565, %v563
  %v664 = vpack.c.b16 %v566, %v564
  %v665 = vpack.c.b16 %v569, %v567
  %v666 = vpack.c.b16 %v570, %v568
  %v667 = vpack.c.b16 %v573, %v571
  %v668 = vpack.c.b16 %v574, %v572
  %v669 = vpack.c.b16 %v577, %v575
  %v670 = vpack.c.b16 %v578, %v576
  %v671 = vpack.c.b16 %v581, %v579
  %v672 = vpack.c.b16 %v582, %v580
  %v673 = vpack.c.b16 %v585, %v583
  %v674 = vpack.c.b16 %v586, %v584
  %v675 = vpack.c.b16 %v589, %v587
  %v676 = vpack.c.b16 %v590, %v588
  %v677 = vpack.c.b16 %v593, %v591
  %v678 = vpack.c.b16 %v594, %v592
  %v679 = vpack.c.b16 %v597, %v595
  %v680 = vpack.c.b16 %v598, %v596
  %v681 = vpack.c.b16 %v601, %v599
  %v682 = vpack.c.b16 %v602, %v600
  %v683 = vpack.c.b16 %v605, %v603
  %v684 = vpack.c.b16 %v606, %v604
  %v685 = vpack.c.b16 %v609, %v607
  %v686 = vpack.c.b16 %v610, %v608
  %v687 = vpack.c.b16 %v613, %v611
  %v688 = vpack.c.b16 %v614, %v612
  %v689 = vpack.c.b16 %v617, %v615
  %v690 = vpack.c.b16 %v618, %v616
  %v691 = vpack.c.b16 %v621, %v619
  %v692 = vpack.c.b16 %v622, %v620
  %v693 = vpack.c.b16 %v625, %v623
  %v694 = vpack.c.b16 %v626, %v624
  %v695 = vpack.c.b16 %v629, %v627
  %v696 = vpack.c.b16 %v630, %v628
  %v697 = vpack.c.b16 %v633, %v631
  %v698 = vpack.c.b16 %v634, %v632
  %763 = vmatprep.subr.bf16.mxu0 %v636
  %764 = vmatpush1.bf16.msra.mxu0 %v635
  %765 = vmatprep.subr.bf16.mxu0 %v638
  %766 = vmatpush1.bf16.msra.mxu0 %v637
  %767 = vmatprep.subr.bf16.mxu0 %v640
  %768 = vmatpush1.bf16.msra.mxu0 %v639
  %769 = vmatprep.subr.bf16.mxu0 %v642
  %770 = vmatpush1.bf16.msra.mxu0 %v641
  %771 = vmatprep.subr.bf16.mxu0 %v644
  %772 = vmatpush1.bf16.msra.mxu0 %v643
  %773 = vmatprep.subr.bf16.mxu0 %v646
  %774 = vmatpush1.bf16.msra.mxu0 %v645
  %775 = vmatprep.subr.bf16.mxu0 %v648
  %776 = vmatpush1.bf16.msra.mxu0 %v647
  %777 = vmatprep.subr.bf16.mxu0 %v650
  %778 = vmatpush1.bf16.msra.mxu0 %v649
  %779 = vmatprep.subr.bf16.mxu0 %v652
  %780 = vmatpush1.bf16.msra.mxu0 %v651
  %781 = vmatprep.subr.bf16.mxu0 %v654
  %782 = vmatpush1.bf16.msra.mxu0 %v653
  %783 = vmatprep.subr.bf16.mxu0 %v656
  %784 = vmatpush1.bf16.msra.mxu0 %v655
  %785 = vmatprep.subr.bf16.mxu0 %v658
  %786 = vmatpush1.bf16.msra.mxu0 %v657
  %787 = vmatprep.subr.bf16.mxu0 %v660
  %788 = vmatpush1.bf16.msra.mxu0 %v659
  %789 = vmatprep.subr.bf16.mxu0 %v662
  %790 = vmatpush1.bf16.msra.mxu0 %v661
  %791 = vmatprep.subr.bf16.mxu0 %v664
  %792 = vmatpush1.bf16.msra.mxu0 %v663
  %793 = vmatprep.subr.bf16.mxu0 %v666
  %794 = vmatpush1.bf16.msra.mxu0 %v665
  %795 = vmatprep.mubr.bf16.mxu0 %v364
  %796 = vmatmul.mubr.bf16.gmra.mrb[0].mxu0 %v363
  %v797 = vpop.f32.mrb[0].mxu0
  %v798 = vadd.f32 %v436, %v797
  %v799 = vpop.f32.mrb[0].mxu0
  %v800 = vadd.f32 %v440, %v799
  %v801 = vpop.f32.mrb[0].mxu0
  %v802 = vpop.f32.mrb[0].mxu0
  %803 = vdwg.mxu0
  %804 = vmatprep.subr.bf16.mxu0 %v668
  %805 = vmatpush1.bf16.msra.mxu0 %v667
  %806 = vmatprep.subr.bf16.mxu0 %v670
  %807 = vmatpush1.bf16.msra.mxu0 %v669
  %808 = vmatprep.subr.bf16.mxu0 %v672
  %809 = vmatpush1.bf16.msra.mxu0 %v671
  %810 = vmatprep.subr.bf16.mxu0 %v674
  %811 = vmatpush1.bf16.msra.mxu0 %v673
  %812 = vmatprep.subr.bf16.mxu0 %v676
  %813 = vmatpush1.bf16.msra.mxu0 %v675
  %814 = vmatprep.subr.bf16.mxu0 %v678
  %815 = vmatpush1.bf16.msra.mxu0 %v677
  %816 = vmatprep.subr.bf16.mxu0 %v680
  %817 = vmatpush1.bf16.msra.mxu0 %v679
  %818 = vmatprep.subr.bf16.mxu0 %v682
  %819 = vmatpush1.bf16.msra.mxu0 %v681
  %820 = vmatprep.subr.bf16.mxu0 %v684
  %821 = vmatpush1.bf16.msra.mxu0 %v683
  %822 = vmatprep.subr.bf16.mxu0 %v686
  %823 = vmatpush1.bf16.msra.mxu0 %v685
  %824 = vmatprep.subr.bf16.mxu0 %v688
  %825 = vmatpush1.bf16.msra.mxu0 %v687
  %826 = vmatprep.subr.bf16.mxu0 %v690
  %827 = vmatpush1.bf16.msra.mxu0 %v689
  %828 = vmatprep.subr.bf16.mxu0 %v692
  %829 = vmatpush1.bf16.msra.mxu0 %v691
  %830 = vmatprep.subr.bf16.mxu0 %v694
  %831 = vmatpush1.bf16.msra.mxu0 %v693
  %832 = vmatprep.subr.bf16.mxu0 %v696
  %833 = vmatpush1.bf16.msra.mxu0 %v695
  %834 = vmatprep.subr.bf16.mxu0 %v698
  %835 = vmatpush1.bf16.msra.mxu0 %v697
  %836 = vmatprep.mubr.bf16.mxu0 %v366
  %837 = vmatmul.mubr.bf16.gmra.mrb[0].mxu0 %v365
  %v838 = vpop.f32.mrb[0].mxu0
  %v839 = vadd.f32 %v798, %v838
  %v840 = vpop.f32.mrb[0].mxu0
  %v841 = vadd.f32 %v800, %v840
  %v842 = vpop.f32.mrb[0].mxu0
  %v843 = vpop.f32.mrb[0].mxu0
  %844 = vdwg.mxu0
  %v845 = vmul.f32 %v839, 0.5
  %v846 = vmul.f32 %v841, 0.5
  %v847 = vmul.f32 %v839, 0.70710677
  %v848 = vmul.f32 %v841, 0.70710677
  %v849 = verf.f32.pop %v847
  %v850 = verf.f32.pop %v848
  %v851 = vadd.f32 %v849, 1.0
  %v852 = vadd.f32 %v850, 1.0
  %v853 = vmul.f32 %v845, %v851
  %v854 = vmul.f32 %v846, %v852
  %v855 = vpack.c.bf16 %v853, %v853
  %v856 = vpack.c.bf16 %v854, %v854
  %v857 = vld [vmem:[%s5] sm:$0xf]
  %v858 = vld [vmem:[%s5 + $0x4] sm:$0xf]
  %v859 = vld [vmem:[%s5 + $0x8] sm:$0xf]
  %v860 = vld [vmem:[%s5 + $0xc] sm:$0xf]
  %v861 = vld [vmem:[%s5 + $0x10] sm:$0xf]
  %v862 = vld [vmem:[%s5 + $0x14] sm:$0xf]
  %v863 = vld [vmem:[%s5 + $0x18] sm:$0xf]
  %v864 = vld [vmem:[%s5 + $0x1c] sm:$0xf]
  %v865 = vld [vmem:[%s5 + $0x20] sm:$0xf]
  %v866 = vld [vmem:[%s5 + $0x24] sm:$0xf]
  %v867 = vld [vmem:[%s5 + $0x28] sm:$0xf]
  %v868 = vld [vmem:[%s5 + $0x2c] sm:$0xf]
  %v869 = vld [vmem:[%s5 + $0x30] sm:$0xf]
  %v870 = vld [vmem:[%s5 + $0x34] sm:$0xf]
  %v871 = vld [vmem:[%s5 + $0x38] sm:$0xf]
  %v872 = vld [vmem:[%s5 + $0x3c] sm:$0xf]
  %v873 = vld [vmem:[%s5 + $0x40] sm:$0xf]
  %v874 = vld [vmem:[%s5 + $0x44] sm:$0xf]
  %v875 = vld [vmem:[%s5 + $0x48] sm:$0xf]
  %v876 = vld [vmem:[%s5 + $0x4c] sm:$0xf]
  %v877 = vld [vmem:[%s5 + $0x50] sm:$0xf]
  %v878 = vld [vmem:[%s5 + $0x54] sm:$0xf]
  %v879 = vld [vmem:[%s5 + $0x58] sm:$0xf]
  %v880 = vld [vmem:[%s5 + $0x5c] sm:$0xf]
  %v881 = vld [vmem:[%s5 + $0x60] sm:$0xf]
  %v882 = vld [vmem:[%s5 + $0x64] sm:$0xf]
  %v883 = vld [vmem:[%s5 + $0x68] sm:$0xf]
  %v884 = vld [vmem:[%s5 + $0x6c] sm:$0xf]
  %v885 = vld [vmem:[%s5 + $0x70] sm:$0xf]
  %v886 = vld [vmem:[%s5 + $0x74] sm:$0xf]
  %v887 = vld [vmem:[%s5 + $0x78] sm:$0xf]
  %v888 = vld [vmem:[%s5 + $0x7c] sm:$0xf]
  %v889 = vld [vmem:[%s6] sm:$0x1]
  %v891 = vlaneseq
  %v892 = vshrl.u32 %v891, 7
  %v893 = vsub.s32 0, %v892
  %v894 = vrot.slane %v889, %v893
  %v928 = vunpack.c.l.b16 %v857
  %v929 = vunpack.c.l.b16 %v858
  %v930 = vunpack.c.l.b16 %v859
  %v931 = vunpack.c.l.b16 %v860
  %v932 = vunpack.c.l.b16 %v861
  %v933 = vunpack.c.l.b16 %v862
  %v934 = vunpack.c.l.b16 %v863
  %v935 = vunpack.c.l.b16 %v864
  %v936 = vunpack.c.l.b16 %v865
  %v937 = vunpack.c.l.b16 %v866
  %v938 = vunpack.c.l.b16 %v867
  %v939 = vunpack.c.l.b16 %v868
  %v940 = vunpack.c.l.b16 %v869
  %v941 = vunpack.c.l.b16 %v870
  %v942 = vunpack.c.l.b16 %v871
  %v943 = vunpack.c.l.b16 %v872
  %v944 = vunpack.c.l.b16 %v873
  %v945 = vunpack.c.l.b16 %v874
  %v946 = vunpack.c.l.b16 %v875
  %v947 = vunpack.c.l.b16 %v876
  %v948 = vunpack.c.l.b16 %v877
  %v949 = vunpack.c.l.b16 %v878
  %v950 = vunpack.c.l.b16 %v879
  %v951 = vunpack.c.l.b16 %v880
  %v952 = vunpack.c.l.b16 %v881
  %v953 = vunpack.c.l.b16 %v882
  %v954 = vunpack.c.l.b16 %v883
  %v955 = vunpack.c.l.b16 %v884
  %v956 = vunpack.c.l.b16 %v885
  %v957 = vunpack.c.l.b16 %v886
  %v958 = vunpack.c.l.b16 %v887
  %v959 = vunpack.c.l.b16 %v888
  %v960 = vpack.c.b16 %v929, %v928
  %v961 = vpack.c.b16 %v931, %v930
  %v962 = vpack.c.b16 %v933, %v932
  %v963 = vpack.c.b16 %v935, %v934
  %v964 = vpack.c.b16 %v937, %v936
  %v965 = vpack.c.b16 %v939, %v938
  %v966 = vpack.c.b16 %v941, %v940
  %v967 = vpack.c.b16 %v943, %v942
  %v968 = vpack.c.b16 %v945, %v944
  %v969 = vpack.c.b16 %v947, %v946
  %v970 = vpack.c.b16 %v949, %v948
  %v971 = vpack.c.b16 %v951, %v950
  %v972 = vpack.c.b16 %v953, %v952
  %v973 = vpack.c.b16 %v955, %v954
  %v974 = vpack.c.b16 %v957, %v956
  %v975 = vpack.c.b16 %v959, %v958
  %992 = vmatprep.subr.bf16.mxu0 0
  %993 = vmatpush1.bf16.msra.mxu0 %v960
  %994 = vmatprep.subr.bf16.mxu0 0
  %995 = vmatpush1.bf16.msra.mxu0 %v961
  %996 = vmatprep.subr.bf16.mxu0 0
  %997 = vmatpush1.bf16.msra.mxu0 %v962
  %998 = vmatprep.subr.bf16.mxu0 0
  %999 = vmatpush1.bf16.msra.mxu0 %v963
  %1000 = vmatprep.subr.bf16.mxu0 0
  %1001 = vmatpush1.bf16.msra.mxu0 %v964
  %1002 = vmatprep.subr.bf16.mxu0 0
  %1003 = vmatpush1.bf16.msra.mxu0 %v965
  %1004 = vmatprep.subr.bf16.mxu0 0
  %1005 = vmatpush1.bf16.msra.mxu0 %v966
  %1006 = vmatprep.subr.bf16.mxu0 0
  %1007 = vmatpush1.bf16.msra.mxu0 %v967
  %1008 = vmatprep.subr.bf16.mxu0 0
  %1009 = vmatpush1.bf16.msra.mxu0 %v968
  %1010 = vmatprep.subr.bf16.mxu0 0
  %1011 = vmatpush1.bf16.msra.mxu0 %v969
  %1012 = vmatprep.subr.bf16.mxu0 0
  %1013 = vmatpush1.bf16.msra.mxu0 %v970
  %1014 = vmatprep.subr.bf16.mxu0 0
  %1015 = vmatpush1.bf16.msra.mxu0 %v971
  %1016 = vmatprep.subr.bf16.mxu0 0
  %1017 = vmatpush1.bf16.msra.mxu0 %v972
  %1018 = vmatprep.subr.bf16.mxu0 0
  %1019 = vmatpush1.bf16.msra.mxu0 %v973
  %1020 = vmatprep.subr.bf16.mxu0 0
  %1021 = vmatpush1.bf16.msra.mxu0 %v974
  %1022 = vmatprep.subr.bf16.mxu0 0
  %1023 = vmatpush1.bf16.msra.mxu0 %v975
  %1024 = vmatprep.mubr.bf16.mxu0 %v856
  %1025 = vmatmul.mubr.bf16.gmra.mrb[0].mxu0 %v855
  %v1026 = vpop.f32.mrb[0].mxu0
  %v1027 = vadd.f32 %v894, %v1026
  %v1028 = vpop.f32.mrb[0].mxu0
  %v1029 = vpop.f32.mrb[0].mxu0
  %v1030 = vpop.f32.mrb[0].mxu0
  %1031 = vdwg.mxu0
  %v1032 = vmul.f32 %v1027, 0.5
  %v1033 = vmul.f32 %v1027, 0.70710677
  %v1034 = verf.f32.pop %v1033
  %v1035 = vadd.f32 %v1034, 1.0
  %v1036 = vmul.f32 %v1032, %v1035
  %v1037 = vpack.c.bf16 %v1036, %v1036
  %v1038 = vld [vmem:[%s7] sm:$0xf]
  %v1039 = vld [vmem:[%s7 + $0x4] sm:$0xf]
  %v1040 = vld [vmem:[%s7 + $0x8] sm:$0xf]
  %v1041 = vld [vmem:[%s7 + $0xc] sm:$0xf]
  %v1042 = vld [vmem:[%s7 + $0x10] sm:$0xf]
  %v1043 = vld [vmem:[%s7 + $0x14] sm:$0xf]
  %v1044 = vld [vmem:[%s7 + $0x18] sm:$0xf]
  %v1045 = vld [vmem:[%s7 + $0x1c] sm:$0xf]
  %v1046 = vld [vmem:[%s7 + $0x20] sm:$0xf]
  %v1047 = vld [vmem:[%s7 + $0x24] sm:$0xf]
  %v1048 = vld [vmem:[%s7 + $0x28] sm:$0xf]
  %v1049 = vld [vmem:[%s7 + $0x2c] sm:$0xf]
  %v1050 = vld [vmem:[%s7 + $0x30] sm:$0xf]
  %v1051 = vld [vmem:[%s7 + $0x34] sm:$0xf]
  %v1052 = vld [vmem:[%s7 + $0x38] sm:$0xf]
  %v1053 = vld [vmem:[%s7 + $0x3c] sm:$0xf]
  %v1054 = vld [vmem:[%s8] sm:$0x1]
  %v1056 = vlaneseq
  %v1057 = vshrl.u32 %v1056, 7
  %v1058 = vsub.s32 0, %v1057
  %v1059 = vrot.slane %v1054, %v1058
  %v1077 = vunpack.c.l.b16 %v1038
  %v1078 = vunpack.c.l.b16 %v1039
  %v1079 = vunpack.c.l.b16 %v1040
  %v1080 = vunpack.c.l.b16 %v1041
  %v1081 = vunpack.c.l.b16 %v1042
  %v1082 = vunpack.c.l.b16 %v1043
  %v1083 = vunpack.c.l.b16 %v1044
  %v1084 = vunpack.c.l.b16 %v1045
  %v1085 = vunpack.c.l.b16 %v1046
  %v1086 = vunpack.c.l.b16 %v1047
  %v1087 = vunpack.c.l.b16 %v1048
  %v1088 = vunpack.c.l.b16 %v1049
  %v1089 = vunpack.c.l.b16 %v1050
  %v1090 = vunpack.c.l.b16 %v1051
  %v1091 = vunpack.c.l.b16 %v1052
  %v1092 = vunpack.c.l.b16 %v1053
  %v1093 = vpack.c.b16 %v1078, %v1077
  %v1094 = vpack.c.b16 %v1080, %v1079
  %v1095 = vpack.c.b16 %v1082, %v1081
  %v1096 = vpack.c.b16 %v1084, %v1083
  %v1097 = vpack.c.b16 %v1086, %v1085
  %v1098 = vpack.c.b16 %v1088, %v1087
  %v1099 = vpack.c.b16 %v1090, %v1089
  %v1100 = vpack.c.b16 %v1092, %v1091
  %1109 = vmatprep.subr.bf16.mxu0 0
  %1110 = vmatpush1.bf16.msra.mxu0 %v1093
  %1111 = vmatprep.subr.bf16.mxu0 0
  %1112 = vmatpush1.bf16.msra.mxu0 %v1094
  %1113 = vmatprep.subr.bf16.mxu0 0
  %1114 = vmatpush1.bf16.msra.mxu0 %v1095
  %1115 = vmatprep.subr.bf16.mxu0 0
  %1116 = vmatpush1.bf16.msra.mxu0 %v1096
  %1117 = vmatprep.subr.bf16.mxu0 0
  %1118 = vmatpush1.bf16.msra.mxu0 %v1097
  %1119 = vmatprep.subr.bf16.mxu0 0
  %1120 = vmatpush1.bf16.msra.mxu0 %v1098
  %1121 = vmatprep.subr.bf16.mxu0 0
  %1122 = vmatpush1.bf16.msra.mxu0 %v1099
  %1123 = vmatprep.subr.bf16.mxu0 0
  %1124 = vmatpush1.bf16.msra.mxu0 %v1100
  %1125 = vmatprep.subr.bf16.mxu0 0
  %1126 = vmatpush1.bf16.msra.mxu0 0
  %1127 = vmatprep.subr.bf16.mxu0 0
  %1128 = vmatpush1.bf16.msra.mxu0 0
  %1129 = vmatprep.subr.bf16.mxu0 0
  %1130 = vmatpush1.bf16.msra.mxu0 0
  %1131 = vmatprep.subr.bf16.mxu0 0
  %1132 = vmatpush1.bf16.msra.mxu0 0
  %1133 = vmatprep.subr.bf16.mxu0 0
  %1134 = vmatpush1.bf16.msra.mxu0 0
  %1135 = vmatprep.subr.bf16.mxu0 0
  %1136 = vmatpush1.bf16.msra.mxu0 0
  %1137 = vmatprep.subr.bf16.mxu0 0
  %1138 = vmatpush1.bf16.msra.mxu0 0
  %1139 = vmatprep.subr.bf16.mxu0 0
  %1140 = vmatpush1.bf16.msra.mxu0 0
  %1141 = vmatprep.mubr.bf16.mxu0 0
  %1142 = vmatmul.mubr.bf16.gmra.mrb[0].mxu0 %v1037
  %v1143 = vpop.f32.mrb[0].mxu0
  %v1144 = vadd.f32 %v1059, %v1143
  %v1145 = vpop.f32.mrb[0].mxu0
  %v1146 = vpop.f32.mrb[0].mxu0
  %v1147 = vpop.f32.mrb[0].mxu0
  %1148 = vdwg.mxu0
  %v1149 = vmul.f32 %v1144, 0.5
  %v1150 = vmul.f32 %v1144, 0.70710677
  %v1151 = verf.f32.pop %v1150
  %v1152 = vadd.f32 %v1151, 1.0
  %v1153 = vmul.f32 %v1149, %v1152
  %v1154 = vpack.c.bf16 %v1153, %v1153
  %v1155 = vld [vmem:[%s9] sm:$0xf]
  %v1156 = vld [vmem:[%s9 + $0x4] sm:$0xf]
  %v1157 = vld [vmem:[%s9 + $0x8] sm:$0xf]
  %v1158 = vld [vmem:[%s9 + $0xc] sm:$0xf]
  %v1159 = vld [vmem:[%s9 + $0x10] sm:$0xf]
  %v1160 = vld [vmem:[%s9 + $0x14] sm:$0xf]
  %v1161 = vld [vmem:[%s9 + $0x18] sm:$0xf]
  %v1162 = vld [vmem:[%s9 + $0x1c] sm:$0xf]
  %v1163 = vld [vmem:[%s10] sm:$0x1]
  %v1165 = vlaneseq
  %v1166 = vshrl.u32 %v1165, 7
  %v1167 = vsub.s32 0, %v1166
  %v1168 = vrot.slane %v1163, %v1167
  %v1178 = vunpack.c.l.b16 %v1155
  %v1179 = vunpack.c.l.b16 %v1156
  %v1180 = vunpack.c.l.b16 %v1157
  %v1181 = vunpack.c.l.b16 %v1158
  %v1182 = vunpack.c.l.b16 %v1159
  %v1183 = vunpack.c.l.b16 %v1160
  %v1184 = vunpack.c.l.b16 %v1161
  %v1185 = vunpack.c.l.b16 %v1162
  %v1186 = vpack.c.b16 %v1179, %v1178
  %v1187 = vpack.c.b16 %v1181, %v1180
  %v1188 = vpack.c.b16 %v1183, %v1182
  %v1189 = vpack.c.b16 %v1185, %v1184
  %vm1194 = vcmask 523264
  %v1196 = vsel %vm1194, %v1154, 0
  %1198 = vmatprep.subr.bf16.mxu0 0
  %1199 = vmatpush1.bf16.msra.mxu0 %v1186
  %1200 = vmatprep.subr.bf16.mxu0 0
  %1201 = vmatpush1.bf16.msra.mxu0 %v1187
  %1202 = vmatprep.subr.bf16.mxu0 0
  %1203 = vmatpush1.bf16.msra.mxu0 %v1188
  %1204 = vmatprep.subr.bf16.mxu0 0
  %1205 = vmatpush1.bf16.msra.mxu0 %v1189
  %1206 = vmatprep.subr.bf16.mxu0 0
  %1207 = vmatpush1.bf16.msra.mxu0 0
  %1208 = vmatprep.subr.bf16.mxu0 0
  %1209 = vmatpush1.bf16.msra.mxu0 0
  %1210 = vmatprep.subr.bf16.mxu0 0
  %1211 = vmatpush1.bf16.msra.mxu0 0
  %1212 = vmatprep.subr.bf16.mxu0 0
  %1213 = vmatpush1.bf16.msra.mxu0 0
  %1214 = vmatprep.subr.bf16.mxu0 0
  %1215 = vmatpush1.bf16.msra.mxu0 0
  %1216 = vmatprep.subr.bf16.mxu0 0
  %1217 = vmatpush1.bf16.msra.mxu0 0
  %1218 = vmatprep.subr.bf16.mxu0 0
  %1219 = vmatpush1.bf16.msra.mxu0 0
  %1220 = vmatprep.subr.bf16.mxu0 0
  %1221 = vmatpush1.bf16.msra.mxu0 0
  %1222 = vmatprep.subr.bf16.mxu0 0
  %1223 = vmatpush1.bf16.msra.mxu0 0
  %1224 = vmatprep.subr.bf16.mxu0 0
  %1225 = vmatpush1.bf16.msra.mxu0 0
  %1226 = vmatprep.subr.bf16.mxu0 0
  %1227 = vmatpush1.bf16.msra.mxu0 0
  %1228 = vmatprep.subr.bf16.mxu0 0
  %1229 = vmatpush1.bf16.msra.mxu0 0
  %1230 = vmatprep.mubr.bf16.mxu0 0
  %1231 = vmatmul.mubr.bf16.gmra.mrb[0].mxu0 %v1196
  %v1232 = vpop.f32.mrb[0].mxu0
  %v1233 = vadd.f32 %v1168, %v1232
  %v1234 = vpop.f32.mrb[0].mxu0
  %v1235 = vpop.f32.mrb[0].mxu0
  %v1236 = vpop.f32.mrb[0].mxu0
  %1237 = vdwg.mxu0
  %v1238 = vmul.f32 %v1233, 0.5
  %v1239 = vmul.f32 %v1233, 0.70710677
  %v1240 = verf.f32.pop %v1239
  %v1241 = vadd.f32 %v1240, 1.0
  %v1242 = vmul.f32 %v1238, %v1241
  %v1243 = vpack.c.bf16 %v1242, %v1242
  %v1244 = vld [vmem:[%s11] sm:$0xf]
  %v1245 = vld [vmem:[%s11 + $0x4] sm:$0xf]
  %v1246 = vld [vmem:[%s11 + $0x8] sm:$0xf]
  %v1247 = vld [vmem:[%s11 + $0xc] sm:$0xf]
  %v1248 = vld [vmem:[%s12] sm:$0x1]
  %v1250 = vlaneseq
  %v1251 = vshrl.u32 %v1250, 7
  %v1252 = vsub.s32 0, %v1251
  %v1253 = vrot.slane %v1248, %v1252
  %v1259 = vunpack.c.l.b16 %v1244
  %v1260 = vunpack.c.l.b16 %v1245
  %v1261 = vunpack.c.l.b16 %v1246
  %v1262 = vunpack.c.l.b16 %v1247
  %v1263 = vpack.c.b16 %v1260, %v1259
  %v1264 = vpack.c.b16 %v1262, %v1261
  %vm1267 = vcmask 261120
  %v1269 = vsel %vm1267, %v1243, 0
  %1271 = vmatprep.subr.bf16.mxu0 0
  %1272 = vmatpush1.bf16.msra.mxu0 %v1263
  %1273 = vmatprep.subr.bf16.mxu0 0
  %1274 = vmatpush1.bf16.msra.mxu0 %v1264
  %1275 = vmatprep.subr.bf16.mxu0 0
  %1276 = vmatpush1.bf16.msra.mxu0 0
  %1277 = vmatprep.subr.bf16.mxu0 0
  %1278 = vmatpush1.bf16.msra.mxu0 0
  %1279 = vmatprep.subr.bf16.mxu0 0
  %1280 = vmatpush1.bf16.msra.mxu0 0
  %1281 = vmatprep.subr.bf16.mxu0 0
  %1282 = vmatpush1.bf16.msra.mxu0 0
  %1283 = vmatprep.subr.bf16.mxu0 0
  %1284 = vmatpush1.bf16.msra.mxu0 0
  %1285 = vmatprep.subr.bf16.mxu0 0
  %1286 = vmatpush1.bf16.msra.mxu0 0
  %1287 = vmatprep.subr.bf16.mxu0 0
  %1288 = vmatpush1.bf16.msra.mxu0 0
  %1289 = vmatprep.subr.bf16.mxu0 0
  %1290 = vmatpush1.bf16.msra.mxu0 0
  %1291 = vmatprep.subr.bf16.mxu0 0
  %1292 = vmatpush1.bf16.msra.mxu0 0
  %1293 = vmatprep.subr.bf16.mxu0 0
  %1294 = vmatpush1.bf16.msra.mxu0 0
  %1295 = vmatprep.subr.bf16.mxu0 0
  %1296 = vmatpush1.bf16.msra.mxu0 0
  %1297 = vmatprep.subr.bf16.mxu0 0
  %1298 = vmatpush1.bf16.msra.mxu0 0
  %1299 = vmatprep.subr.bf16.mxu0 0
  %1300 = vmatpush1.bf16.msra.mxu0 0
  %1301 = vmatprep.subr.bf16.mxu0 0
  %1302 = vmatpush1.bf16.msra.mxu0 0
  %1303 = vmatprep.mubr.bf16.mxu0 0
  %1304 = vmatmul.mubr.bf16.gmra.mrb[0].mxu0 %v1269
  %v1305 = vpop.f32.mrb[0].mxu0
  %v1306 = vadd.f32 %v1253, %v1305
  %v1307 = vpop.f32.mrb[0].mxu0
  %v1308 = vpop.f32.mrb[0].mxu0
  %v1309 = vpop.f32.mrb[0].mxu0
  %1310 = vdwg.mxu0
  %1311 = vst [vmem:[%s13] sm:$0xff] %v1306
  // Predicated region
  $region54: #{_lambda_.1} parent=0 // pred_check
    _
  $region55: #{_lambda_.1} parent=0 // pred_check_branch
    %1313 = sbr.rel (0) target = $region57
  $region56: #{_lambda_.1} parent=0 // pred_region
    _
  $region57: #{_lambda_.1} parent=0 // pred_fallthru
    _
  // Predicated region
  $region58: #{_lambda_.1} parent=0 // pred_check
    _
  $region59: #{_lambda_.1} parent=0 // pred_check_branch
    %1315 = sbr.rel (0) target = $region61
  $region60: #{_lambda_.1} parent=0 // pred_region
    _
  $region61: #{_lambda_.1} parent=0 // pred_fallthru
    _

</llo_original>
